<compile_context>
chip_gen: v7x
topology: tpu7x:2x2x1
jax: 0.10.0
libtpu: 0.0.40
codegen_flags: <defaults>
</compile_context>

<pallas_src>
import functools

import jax
import jax.numpy as jnp
from jax import lax
from jax.experimental import pallas as pl
from jax.experimental.pallas import tpu as pltpu

_VMEM_LIMIT = 40 * 1024 * 1024
_BN_EPS = 1e-5


def _round_up(x, m):
    return (x + m - 1) // m * m


# ----------------------------------------------------------------------------
# Pallas kernels
# ----------------------------------------------------------------------------
def _matmul_kernel(*refs, has_bias, want_stats):
    """Tiled MXU matmul with an f32 accumulator.

    Optional epilogues executed at the last K step:
      * bias add (FC layer)
      * per-M-tile column sum / sum-of-squares (fused BatchNorm statistics)
    """
    a_ref, b_ref = refs[0], refs[1]
    pos = 2
    bias_ref = None
    if has_bias:
        bias_ref = refs[pos]
        pos += 1
    o_ref = refs[pos]
    pos += 1
    stats_ref = None
    if want_stats:
        stats_ref = refs[pos]
        pos += 1
    acc_ref = refs[pos]

    @pl.when(pl.program_id(2) == 0)
    def _():
        acc_ref[...] = jnp.zeros_like(acc_ref)

    acc_ref[...] += jnp.dot(a_ref[...], b_ref[...],
                            preferred_element_type=jnp.float32)

    @pl.when(pl.program_id(2) == pl.num_programs(2) - 1)
    def _():
        acc = acc_ref[...]
        if has_bias:
            acc = acc + bias_ref[...]
        o_ref[...] = acc.astype(o_ref.dtype)
        if want_stats:
            col_sum = jnp.sum(acc, axis=0, keepdims=True)       # (1, tn)
            col_sq = jnp.sum(acc * acc, axis=0, keepdims=True)  # (1, tn)
            rows = lax.broadcasted_iota(jnp.int32, stats_ref.shape, 0)
            stats_ref[...] = jnp.where(
                rows == 0, col_sum, jnp.where(rows == 1, col_sq, 0.0))


def _affine_kernel(x_ref, scale_ref, shift_ref, o_ref, *, relu):
    y = x_ref[...].astype(jnp.float32) * scale_ref[...] + shift_ref[...]
    if relu:
        y = jnp.maximum(y, 0.0)
    o_ref[...] = y.astype(o_ref.dtype)


def _affine_residual_kernel(x_ref, scale_ref, shift_ref, r_ref, o_ref):
    y = x_ref[...].astype(jnp.float32) * scale_ref[...] + shift_ref[...]
    y = y + r_ref[...].astype(jnp.float32)
    o_ref[...] = jnp.maximum(y, 0.0).astype(o_ref.dtype)


def _max9_kernel(*refs):
    o_ref = refs[-1]
    m = refs[0][...]
    for r in refs[1:-1]:
        m = jnp.maximum(m, r[...])
    o_ref[...] = m


def _avgpool_kernel(x_ref, o_ref):
    o_ref[...] = jnp.mean(x_ref[...].astype(jnp.float32), axis=1,
                          keepdims=True)


# ----------------------------------------------------------------------------
# Pallas wrappers
# ----------------------------------------------------------------------------
def pallas_matmul(a, b, bias=None, want_stats=False, out_dtype=jnp.bfloat16):
    """Tiled bf16 MXU matmul.

    Returns the (row/col padded) product; with want_stats also returns the
    exact per-column sum and sum-of-squares (f32) over the *true* M rows.
    """
    M, K = a.shape
    K2, N = b.shape
    assert K == K2
    has_bias = bias is not None

    # --- output row tiling (M) ---
    tm = 256 if M >= 256 else _round_up(M, 8)
    Mp = _round_up(M, tm)

    # --- output column tiling (N); keep lanes dense for tiny N (FC) ---
    if N % 128 == 0 or N == 64:
        Np = N
    else:
        Np = _round_up(N, 128)
    if Np >= 256 and Np % 256 == 0:
        tn = 256
    elif Np % 128 == 0:
        tn = 128
    else:
        tn = Np          # e.g. N == 64 (block == full dim)

    # --- reduction tiling (K) ---
    if K <= 1152:
        tk, Kp = K, K    # single K step, full-depth tile (block == full dim)
    else:
        tk = None
        for cand in (512, 384, 256, 128):
            if K % cand == 0:
                tk, Kp = cand, K
                break
        if tk is None:
            tk = 512
            Kp = _round_up(K, tk)

    a_p = a if (Mp, Kp) == (M, K) else jnp.pad(a, ((0, Mp - M), (0, Kp - K)))
    b_p = b if (Kp, Np) == (K, N) else jnp.pad(b, ((0, Kp - K), (0, Np - N)))
    a_p = a_p.astype(jnp.bfloat16)
    b_p = b_p.astype(jnp.bfloat16)

    n_i, n_j, n_k = Mp // tm, Np // tn, Kp // tk

    in_specs = [
        pl.BlockSpec((tm, tk), lambda i, j, k: (i, k)),
        pl.BlockSpec((tk, tn), lambda i, j, k: (k, j)),
    ]
    operands = [a_p, b_p]
    if has_bias:
        bias_p = bias.reshape(1, -1).astype(jnp.float32)
        if Np != N:
            bias_p = jnp.pad(bias_p, ((0, 0), (0, Np - N)))
        in_specs.append(pl.BlockSpec((1, tn), lambda i, j, k: (0, j)))
        operands.append(bias_p)

    out_shapes = [jax.ShapeDtypeStruct((Mp, Np), out_dtype)]
    out_specs = [pl.BlockSpec((tm, tn), lambda i, j, k: (i, j))]
    if want_stats:
        # one 8-row stats slab per M tile: row 0 = sum, row 1 = sum of squares
        out_shapes.append(jax.ShapeDtypeStruct((n_i * 8, Np), jnp.float32))
        out_specs.append(pl.BlockSpec((8, tn), lambda i, j, k: (i, j)))

    kernel = functools.partial(_matmul_kernel, has_bias=has_bias,
                               want_stats=want_stats)
    outs = pl.pallas_call(
        kernel,
        out_shape=tuple(out_shapes) if want_stats else out_shapes[0],
        grid=(n_i, n_j, n_k),
        in_specs=in_specs,
        out_specs=tuple(out_specs) if want_stats else out_specs[0],
        scratch_shapes=[pltpu.VMEM((tm, tn), jnp.float32)],
        compiler_params=pltpu.CompilerParams(
            dimension_semantics=("parallel", "parallel", "arbitrary"),
            vmem_limit_bytes=_VMEM_LIMIT),
    )(*operands)

    if want_stats:
        y, stats = outs
        stats = stats.reshape(n_i, 8, Np)
        col_sum = jnp.sum(stats[:, 0, :N], axis=0)   # padded rows are zero
        col_sq = jnp.sum(stats[:, 1, :N], axis=0)
        return y, col_sum, col_sq
    return outs


def pallas_bn_apply(x, scale, shift, residual=None, relu=True):
    """Per-channel affine (BN normalize) + optional residual add + ReLU."""
    Mp, C = x.shape
    if Mp % 512 == 0:
        rt = 512
    elif Mp % 256 == 0:
        rt = 256
    else:
        rt = Mp
    grid = (Mp // rt,)
    scale2 = scale.reshape(1, C).astype(jnp.float32)
    shift2 = shift.reshape(1, C).astype(jnp.float32)
    x_spec = pl.BlockSpec((rt, C), lambda i: (i, 0))
    vec_spec = pl.BlockSpec((1, C), lambda i: (0, 0))
    cparams = pltpu.CompilerParams(dimension_semantics=("parallel",),
                                   vmem_limit_bytes=_VMEM_LIMIT)
    if residual is not None:
        return pl.pallas_call(
            _affine_residual_kernel,
            out_shape=jax.ShapeDtypeStruct((Mp, C), jnp.bfloat16),
            grid=grid,
            in_specs=[x_spec, vec_spec, vec_spec, x_spec],
            out_specs=x_spec,
            compiler_params=cparams,
        )(x, scale2, shift2, residual)
    return pl.pallas_call(
        functools.partial(_affine_kernel, relu=relu),
        out_shape=jax.ShapeDtypeStruct((Mp, C), jnp.bfloat16),
        grid=grid,
        in_specs=[x_spec, vec_spec, vec_spec],
        out_specs=x_spec,
        compiler_params=cparams,
    )(x, scale2, shift2)


def maxpool_3x3_s2(x):
    """MaxPool2d(kernel=3, stride=2, padding=1) on NHWC input."""
    n, h, w, c = x.shape
    ho = (h + 2 - 3) // 2 + 1
    wo = (w + 2 - 3) // 2 + 1
    xp = jnp.pad(x, ((0, 0), (1, 1), (1, 1), (0, 0)),
                 constant_values=-jnp.inf)
    shifted = [xp[:, i:i + 2 * ho:2, j:j + 2 * wo:2, :]
               for i in range(3) for j in range(3)]
    spec = pl.BlockSpec((1, ho, wo, c), lambda b: (b, 0, 0, 0))
    return pl.pallas_call(
        _max9_kernel,
        out_shape=jax.ShapeDtypeStruct((n, ho, wo, c), x.dtype),
        grid=(n,),
        in_specs=[spec] * 9,
        out_specs=spec,
        compiler_params=pltpu.CompilerParams(
            dimension_semantics=("parallel",),
            vmem_limit_bytes=_VMEM_LIMIT),
    )(*shifted)


def global_avgpool(x):
    """AdaptiveAvgPool2d((1, 1)) on NHWC input -> (N, C) float32."""
    n, h, w, c = x.shape
    x2 = x.reshape(n, h * w, c)
    out = pl.pallas_call(
        _avgpool_kernel,
        out_shape=jax.ShapeDtypeStruct((n, 1, c), jnp.float32),
        grid=(n,),
        in_specs=[pl.BlockSpec((1, h * w, c), lambda b: (b, 0, 0))],
        out_specs=pl.BlockSpec((1, 1, c), lambda b: (b, 0, 0)),
        compiler_params=pltpu.CompilerParams(
            dimension_semantics=("parallel",),
            vmem_limit_bytes=_VMEM_LIMIT),
    )(x2)
    return out.reshape(n, c)


def _im2col(x, kh, kw, stride, pad):
    # x: NHWC -> (N*Ho*Wo, kh*kw*C), patch ordering (ki, kj, cin).
    n, h, w, c = x.shape
    ho = (h + 2 * pad - kh) // stride + 1
    wo = (w + 2 * pad - kw) // stride + 1
    xp = jnp.pad(x, ((0, 0), (pad, pad), (pad, pad), (0, 0)))
    cols = [xp[:, i:i + stride * ho:stride, j:j + stride * wo:stride, :]
            for i in range(kh) for j in range(kw)]
    patches = jnp.concatenate(cols, axis=-1)          # (N, Ho, Wo, kh*kw*C)
    return patches.reshape(n * ho * wo, kh * kw * c), (n, ho, wo)


def conv_bn(x, w, gamma, beta, stride, pad, *, relu=True, residual=None):
    """Bias-free conv + training-mode BatchNorm (+residual add) (+ReLU).

    x / residual: NHWC bfloat16.  w: PyTorch layout (Cout, Cin, kh, kw).
    """
    cout, cin, kh, kw = w.shape
    patches, (nb, ho, wo) = _im2col(x, kh, kw, stride, pad)
    m = nb * ho * wo
    w_mat = jnp.transpose(w, (2, 3, 1, 0)).reshape(kh * kw * cin, cout)

    y, s, sq = pallas_matmul(patches, w_mat, want_stats=True)  # y: (Mp, cout)
    mp = y.shape[0]

    # Batch statistics (biased variance) -> per-channel affine.
    mean = s / m
    var = jnp.maximum(sq / m - mean * mean, 0.0)
    scale = gamma * lax.rsqrt(var + _BN_EPS)
    shift = beta - mean * scale

    r = None
    if residual is not None:
        r = residual.reshape(m, cout).astype(jnp.bfloat16)
        if mp != m:
            r = jnp.pad(r, ((0, mp - m), (0, 0)))
    out = pallas_bn_apply(y, scale, shift, residual=r, relu=relu)
    return out[:m].reshape(nb, ho, wo, cout)


def fc_layer(feat, w, b):
    """Linear layer: feat (N, 512) -> logits (N, num_classes), f32."""
    m = feat.shape[0]
    ncls = w.shape[0]
    y = pallas_matmul(feat.astype(jnp.bfloat16),
                      jnp.transpose(w).astype(jnp.bfloat16),
                      bias=b.astype(jnp.float32),
                      want_stats=False,
                      out_dtype=jnp.float32)
    return y[:m, :ncls]


# ----------------------------------------------------------------------------
# ResNet18 parameters & forward
# ----------------------------------------------------------------------------
def init_params(key, num_classes):
    keys = iter(jax.random.split(key, 64))

    def conv(cout, cin, kh, kw):
        std = (2.0 / (cout * kh * kw)) ** 0.5      # kaiming_normal_ fan_out
        return std * jax.random.normal(next(keys), (cout, cin, kh, kw),
                                       jnp.float32)

    def bn(c):
        return jnp.ones((c,), jnp.float32), jnp.zeros((c,), jnp.float32)

    params = {}
    params["conv1_w"] = conv(64, 3, 7, 7)
    params["bn1_g"], params["bn1_b"] = bn(64)

    stage_specs = [(64, 64, 1), (64, 128, 2), (128, 256, 2), (256, 512, 2)]
    stages = []
    for cin, cout, stride in stage_specs:
        blocks = []
        for bidx in range(2):
            s = stride if bidx == 0 else 1
            bcin = cin if bidx == 0 else cout
            blk = {
                "stride": s,
                "conv1_w": conv(cout, bcin, 3, 3),
                "conv2_w": conv(cout, cout, 3, 3),
            }
            blk["bn1_g"], blk["bn1_b"] = bn(cout)
            blk["bn2_g"], blk["bn2_b"] = bn(cout)
            if s != 1 or bcin != cout:
                blk["down_w"] = conv(cout, bcin, 1, 1)
                blk["down_g"], blk["down_b"] = bn(cout)
            blocks.append(blk)
        stages.append(blocks)
    params["stages"] = stages

    fan_in = 512
    bound = 1.0 / (fan_in ** 0.5)
    params["fc_w"] = jax.random.uniform(next(keys), (num_classes, fan_in),
                                        jnp.float32, -bound, bound)
    params["fc_b"] = jax.random.uniform(next(keys), (num_classes,),
                                        jnp.float32, -bound, bound)
    return params


def basic_block(x, p):
    stride = p["stride"]
    if "down_w" in p:
        identity = conv_bn(x, p["down_w"], p["down_g"], p["down_b"],
                           stride, 0, relu=False)
    else:
        identity = x
    out = conv_bn(x, p["conv1_w"], p["bn1_g"], p["bn1_b"], stride, 1,
                  relu=True)
    # bn2 + residual add + relu fused in one Pallas epilogue kernel
    out = conv_bn(out, p["conv2_w"], p["bn2_g"], p["bn2_b"], 1, 1,
                  relu=False, residual=identity)
    return out


def resnet18_forward(params, x_nchw):
    # Accepts NCHW (PyTorch), computes in NHWC bf16, returns (N, num_classes).
    x = jnp.transpose(x_nchw, (0, 2, 3, 1)).astype(jnp.bfloat16)
    x = conv_bn(x, params["conv1_w"], params["bn1_g"], params["bn1_b"],
                2, 3, relu=True)
    x = maxpool_3x3_s2(x)
    for stage in params["stages"]:
        for blk in stage:
            x = basic_block(x, blk)
    feat = global_avgpool(x)                                # (N, 512) f32
    logits = fc_layer(feat, params["fc_w"], params["fc_b"])  # (N, classes)
    return logits


if __name__ == "__main__":
    key = jax.random.PRNGKey(0)
    pkey, xkey = jax.random.split(key)

    num_classes = 10
    params = init_params(pkey, num_classes)

    # Small but valid ResNet input: NCHW, 3 channels, 32x32 spatial.
    x = jax.random.normal(xkey, (2, 3, 32, 32), jnp.float32)

    logits = resnet18_forward(params, x)
    logits = jax.block_until_ready(logits)
    assert logits.shape == (2, num_classes)
    assert bool(jnp.all(jnp.isfinite(logits)))
    print("KERNEL_OK")
</pallas_src>

<mosaic_0001>
module attributes {stable_mosaic.version = 11 : i64} {
  func.func @_matmul_kernel(%arg0: i32, %arg1: i32, %arg2: i32, %arg3: memref<256x147xbf16, #tpu.memory_space<vmem>>, %arg4: memref<147x64xbf16, #tpu.memory_space<vmem>>, %arg5: memref<256x64xbf16, #tpu.memory_space<vmem>>, %arg6: memref<8x64xf32, #tpu.memory_space<vmem>>, %arg7: memref<256x64xf32, #tpu.memory_space<vmem>>) attributes {dimension_semantics = [#tpu.dimension_semantics<parallel>, #tpu.dimension_semantics<parallel>, #tpu.dimension_semantics<arbitrary>], iteration_bounds = array<i64: 2, 1, 1>, scalar_prefetch = 0 : i64, scratch_operands = 1 : i64, tpu.core_type = #tpu.core_type<tc>, window_params = [{transform_indices = @transform_0, window_bounds = array<i64: 256, 147>}, {transform_indices = @transform_1, window_bounds = array<i64: 147, 64>}, {transform_indices = @transform_2, window_bounds = array<i64: 256, 64>}, {transform_indices = @transform_3, window_bounds = array<i64: 8, 64>}]} {
    %c0_i32 = arith.constant 0 : i32
    %0 = arith.cmpi eq, %arg2, %c0_i32 : i32
    %1 = arith.extui %0 : i1 to i32
    %c0_i32_0 = arith.constant 0 : i32
    %2 = arith.cmpi ne, %1, %c0_i32_0 : i32
    scf.if %2 {
      %cst_10 = arith.constant 0.000000e+00 : f32
      %12 = vector.broadcast %cst_10 : f32 to vector<256x64xf32>
      %c0_11 = arith.constant 0 : index
      %c0_12 = arith.constant 0 : index
      %13 = vector.load %arg7[%c0_11, %c0_12] : memref<256x64xf32, #tpu.memory_space<vmem>>, vector<256x64xf32>
      tpu.vector_store %arg7[%c0_11, %c0_12], %12 {strides = array<i32>} : memref<256x64xf32, #tpu.memory_space<vmem>>, vector<256x64xf32>,
    } else {
    }
    %c0 = arith.constant 0 : index
    %c0_1 = arith.constant 0 : index
    %3 = vector.load %arg7[%c0, %c0_1] : memref<256x64xf32, #tpu.memory_space<vmem>>, vector<256x64xf32>
    %c0_2 = arith.constant 0 : index
    %c0_3 = arith.constant 0 : index
    %4 = vector.load %arg3[%c0_2, %c0_3] : memref<256x147xbf16, #tpu.memory_space<vmem>>, vector<256x147xbf16>
    %c0_4 = arith.constant 0 : index
    %c0_5 = arith.constant 0 : index
    %5 = vector.load %arg4[%c0_4, %c0_5] : memref<147x64xbf16, #tpu.memory_space<vmem>>, vector<147x64xbf16>
    %cst = arith.constant dense<0.000000e+00> : vector<256x64xf32>
    %6 = tpu.matmul %4, %5, %cst {dimension_numbers = #tpu.dot_dimension_numbers<[1], [0], [0], [1], [0, 0, 1, 1], [], []>} : vector<256x147xbf16>, vector<147x64xbf16>, vector<256x64xf32> -> vector<256x64xf32>
    %7 = arith.addf %3, %6 : vector<256x64xf32>
    %c0_6 = arith.constant 0 : index
    %c0_7 = arith.constant 0 : index
    %8 = vector.load %arg7[%c0_6, %c0_7] : memref<256x64xf32, #tpu.memory_space<vmem>>, vector<256x64xf32>
    tpu.vector_store %arg7[%c0_6, %c0_7], %7 {strides = array<i32>} : memref<256x64xf32, #tpu.memory_space<vmem>>, vector<256x64xf32>,
    %c0_i32_8 = arith.constant 0 : i32
    %9 = arith.cmpi eq, %arg2, %c0_i32_8 : i32
    %10 = arith.extui %9 : i1 to i32
    %c0_i32_9 = arith.constant 0 : i32
    %11 = arith.cmpi ne, %10, %c0_i32_9 : i32
    scf.if %11 {
      %c0_10 = arith.constant 0 : index
      %c0_11 = arith.constant 0 : index
      %12 = vector.load %arg7[%c0_10, %c0_11] : memref<256x64xf32, #tpu.memory_space<vmem>>, vector<256x64xf32>
      %13 = arith.truncf %12 : vector<256x64xf32> to vector<256x64xbf16>
      %c0_12 = arith.constant 0 : index
      %c0_13 = arith.constant 0 : index
      %14 = vector.load %arg5[%c0_12, %c0_13] : memref<256x64xbf16, #tpu.memory_space<vmem>>, vector<256x64xbf16>
      tpu.vector_store %arg5[%c0_12, %c0_13], %13 {strides = array<i32>} : memref<256x64xbf16, #tpu.memory_space<vmem>>, vector<256x64xbf16>,
      %cst_14 = arith.constant dense<0.000000e+00> : vector<64xf32>
      %15 = vector.multi_reduction <add>, %12, %cst_14 [0] : vector<256x64xf32> to vector<64xf32>
      %16 = vector.shape_cast %15 : vector<64xf32> to vector<1x64xf32>
      %17 = arith.mulf %12, %12 : vector<256x64xf32>
      %cst_15 = arith.constant dense<0.000000e+00> : vector<64xf32>
      %18 = vector.multi_reduction <add>, %17, %cst_15 [0] : vector<256x64xf32> to vector<64xf32>
      %19 = vector.shape_cast %18 : vector<64xf32> to vector<1x64xf32>
      %20 = tpu.iota {dimensions = array<i32: 0>} : vector<8x64xi32>
      %c0_i32_16 = arith.constant 0 : i32
      %21 = vector.broadcast %c0_i32_16 : i32 to vector<8x64xi32>
      %22 = arith.cmpi eq, %20, %21 : vector<8x64xi32>
      %c1_i32 = arith.constant 1 : i32
      %23 = vector.broadcast %c1_i32 : i32 to vector<8x64xi32>
      %24 = arith.cmpi eq, %20, %23 : vector<8x64xi32>
      %cst_17 = arith.constant 0.000000e+00 : f32
      %25 = vector.shape_cast %19 : vector<1x64xf32> to vector<1x64xf32>
      %26 = vector.broadcast %25 : vector<1x64xf32> to vector<8x64xf32>
      %27 = vector.broadcast %cst_17 : f32 to vector<8x64xf32>
      %28 = arith.select %24, %26, %27 : vector<8x64xi1>, vector<8x64xf32>
      %29 = vector.shape_cast %16 : vector<1x64xf32> to vector<1x64xf32>
      %30 = vector.broadcast %29 : vector<1x64xf32> to vector<8x64xf32>
      %31 = arith.select %22, %30, %28 : vector<8x64xi1>, vector<8x64xf32>
      %c0_18 = arith.constant 0 : index
      %c0_19 = arith.constant 0 : index
      %32 = vector.load %arg6[%c0_18, %c0_19] : memref<8x64xf32, #tpu.memory_space<vmem>>, vector<8x64xf32>
      tpu.vector_store %arg6[%c0_18, %c0_19], %31 {strides = array<i32>} : memref<8x64xf32, #tpu.memory_space<vmem>>, vector<8x64xf32>,
    } else {
    }
    return
  }
  func.func @transform_0(%arg0: i32, %arg1: i32, %arg2: i32) -> (i32, i32) {
    %c0_i32 = arith.constant 0 : i32
    return %arg0, %arg2 : i32, i32
  }
  func.func @transform_1(%arg0: i32, %arg1: i32, %arg2: i32) -> (i32, i32) {
    %c0_i32 = arith.constant 0 : i32
    return %arg2, %arg1 : i32, i32
  }
  func.func @transform_2(%arg0: i32, %arg1: i32, %arg2: i32) -> (i32, i32) {
    %c0_i32 = arith.constant 0 : i32
    return %arg0, %arg1 : i32, i32
  }
  func.func @transform_3(%arg0: i32, %arg1: i32, %arg2: i32) -> (i32, i32) {
    %c0_i32 = arith.constant 0 : i32
    return %arg0, %arg1 : i32, i32
  }
}

</mosaic_0001>

<llo_original>
// kernel: tpu_custom_call.1
$region0: #{tpu_custom_call.1}
  #allocation0 [shape = 'u32[]', space=smem, size = 0x4, offset = 0x4, fixed_abs, tag = 'smem constant byte address 0x4 - core index']
  #allocation1 [shape = 'u32[144,128]{1,0:T(1,128)}', space=vmem, size = 0x12000, scoped, tag = 'internal scratch']
  #allocation2 [shape = 'f32[256,64]{1,0:T(8,128)}', space=vmem, size = 0x20000, scoped, tag = 'scratch operand']
  %s0 = inlined_call_operand.vmem [shape: bf16[512,147], index: 0, kind: input, shape index: {}]
  %s1 = inlined_call_operand.vmem [shape: bf16[147,64], index: 1, kind: input, shape index: {}]
  %s2 = inlined_call_operand.vmem [shape: bf16[512,64], index: 2, kind: output, shape index: {0}]
  %s3 = inlined_call_operand.hbm [shape: f32[16,64], index: 3, kind: output, shape index: {1}]
  %4 = xla_tuple %s2, %s3
  %s5 = sld [smem:[#allocation0]]
  $region57: #{tpu_custom_call.1} parent=0
    _
  %s7 = ssub.s32 1, %s5
  %s8 = scalar_select 0, %s7, %s5
  $region1: #{tpu_custom_call.1} parent=0
    #allocation3 [shape = 'u8[8192]{0}', space=vmem, size = 0x2000, scoped, tag = 'output window, operand 1']
    #allocation4 [shape = 's32[2]{0}', space=sflag, size = 0x8, scoped, tag = 'scoped memory for tpu_custom_call.1']
    %9 = vsyncpa [#allocation4], 0
    %s10 = scalar_lea.sflag [#allocation4], 1
    %11 = vsyncpa %s10, 0
    loop: start=0, step=1, limit=4
    $region2: #{tpu_custom_call.1} parent=1 // loop_pre_header
      _
    $region3: #{tpu_custom_call.1} parent=1 // loop_header
      %s13 = sphi 0, %s17
      %p14 = scmp.ge.s32.totalorder %s13, 4
      %s20 = sphi 0, %s39
      %s21 = sphi 0, %s35
      %s22 = sphi 0, %s31
      %s23 = sphi 0, %s20
      %s24 = sphi 0, %s21
      %s25 = sphi 0, %s22
      %s26 = sphi 0, %s23
      %s27 = sphi 0, %s24
      %s28 = sphi 0, %s25
      %s44 = sphi 0, %s46
      %s47 = sphi 0, %s44
      %s48 = sphi 0, %s47
      %s64 = sphi 0, %s48
      %s72 = sphi 0, %s74
      %s75 = sphi 0, %s72
      %s76 = sphi 0, %s75
      %s92 = sphi 0, %s76
      %s100 = sphi 0, %s102
      %s103 = sphi 0, %s100
      %s104 = sphi 0, %s103
      %s120 = sphi 0, %s104
      %s128 = sphi 0, %s130
      %s131 = sphi 0, %s128
      %s132 = sphi 0, %s131
      %s148 = sphi 0, %s132
    $region4: #{tpu_custom_call.1} parent=1 // loop_header_branch
      %16 = sbr.rel (%p14) target = $region8
    $region5: #{tpu_custom_call.1} parent=1 // loop_body
      %s18 = ssub.s32 %s13, 1
      %s19 = ssub.s32 %s13, 2
      %s29 = sadd.s32 1, %s22
      %p30 = scmp.ge.s32.totalorder %s29, 1
      %s31 = scalar_select %p30, 0, %s29
      %s32 = sadd.s32 1, %s21
      %s33 = scalar_select %p30, %s32, %s21
      %p34 = scmp.ge.s32.totalorder %s33, 1
      %s35 = scalar_select %p34, 0, %s33
      %s36 = sadd.s32 1, %s20
      %s37 = scalar_select %p34, %s36, %s20
      %p38 = scmp.ge.s32.totalorder %s37, 2
      %s39 = scalar_select %p38, 0, %s37
      %s40 = ssub.s32 %s20, %s39
      %s41 = ssub.s32 %s22, %s31
      %s42 = sor.u32 %s40, %s41
      %p43 = scmp.eq.s32.totalorder %s42, 0
      %s45 = sadd.s32 %s44, 1
      %s46 = scalar_select %p43, %s44, %s45
      %p49 = pneg %p43
      %p50 = scmp.eq.s32.totalorder %s13, 1
      %p51 = por %p49, %p50
      %p52 = scmp.ne.s32.totalorder %s44, %s47
      %p53 = scmp.eq.s32.totalorder %s13, 0
      %p54 = por %p52, %p53
      %p55 = scmp.ne.s32.totalorder %s44, %s47
      %p56 = scmp.eq.s32.totalorder %s18, 1
      %p57 = por %p55, %p56
      %p58 = scmp.ne.s32.totalorder %s47, %s48
      %p59 = scmp.eq.s32.totalorder %s18, 0
      %p60 = por %p58, %p59
      %p61 = scmp.ne.s32.totalorder %s47, %s48
      %p62 = scmp.eq.s32.totalorder %s19, 1
      %p63 = por %p61, %p62
      %p65 = scmp.ne.s32.totalorder %s48, %s64
      %p66 = scmp.eq.s32.totalorder %s19, 0
      %p67 = por %p65, %p66
      %s68 = ssub.s32 %s22, %s31
      %s69 = ssub.s32 %s21, %s35
      %s70 = sor.u32 %s68, %s69
      %p71 = scmp.eq.s32.totalorder %s70, 0
      %s73 = sadd.s32 %s72, 1
      %s74 = scalar_select %p71, %s72, %s73
      %p77 = pneg %p71
      %p78 = scmp.eq.s32.totalorder %s13, 1
      %p79 = por %p77, %p78
      %p80 = scmp.ne.s32.totalorder %s72, %s75
      %p81 = scmp.eq.s32.totalorder %s13, 0
      %p82 = por %p80, %p81
      %p83 = scmp.ne.s32.totalorder %s72, %s75
      %p84 = scmp.eq.s32.totalorder %s18, 1
      %p85 = por %p83, %p84
      %p86 = scmp.ne.s32.totalorder %s75, %s76
      %p87 = scmp.eq.s32.totalorder %s18, 0
      %p88 = por %p86, %p87
      %p89 = scmp.ne.s32.totalorder %s75, %s76
      %p90 = scmp.eq.s32.totalorder %s19, 1
      %p91 = por %p89, %p90
      %p93 = scmp.ne.s32.totalorder %s76, %s92
      %p94 = scmp.eq.s32.totalorder %s19, 0
      %p95 = por %p93, %p94
      %s96 = ssub.s32 %s20, %s39
      %s97 = ssub.s32 %s21, %s35
      %s98 = sor.u32 %s96, %s97
      %p99 = scmp.eq.s32.totalorder %s98, 0
      %s101 = sadd.s32 %s100, 1
      %s102 = scalar_select %p99, %s100, %s101
      %p105 = pneg %p99
      %p106 = scmp.eq.s32.totalorder %s13, 1
      %p107 = por %p105, %p106
      %p108 = scmp.ne.s32.totalorder %s100, %s103
      %p109 = scmp.eq.s32.totalorder %s13, 0
      %p110 = por %p108, %p109
      %p111 = scmp.ne.s32.totalorder %s100, %s103
      %p112 = scmp.eq.s32.totalorder %s18, 1
      %p113 = por %p111, %p112
      %p114 = scmp.ne.s32.totalorder %s103, %s104
      %p115 = scmp.eq.s32.totalorder %s18, 0
      %p116 = por %p114, %p115
      %p117 = scmp.ne.s32.totalorder %s103, %s104
      %p118 = scmp.eq.s32.totalorder %s19, 1
      %p119 = por %p117, %p118
      %p121 = scmp.ne.s32.totalorder %s104, %s120
      %p122 = scmp.eq.s32.totalorder %s19, 0
      %p123 = por %p121, %p122
      %s124 = ssub.s32 %s20, %s39
      %s125 = ssub.s32 %s21, %s35
      %s126 = sor.u32 %s124, %s125
      %p127 = scmp.eq.s32.totalorder %s126, 0
      %s129 = sadd.s32 %s128, 1
      %s130 = scalar_select %p127, %s128, %s129
      %p133 = pneg %p127
      %p134 = scmp.eq.s32.totalorder %s13, 1
      %p135 = por %p133, %p134
      %p136 = scmp.ne.s32.totalorder %s128, %s131
      %p137 = scmp.eq.s32.totalorder %s13, 0
      %p138 = por %p136, %p137
      %p139 = scmp.ne.s32.totalorder %s128, %s131
      %p140 = scmp.eq.s32.totalorder %s18, 1
      %p141 = por %p139, %p140
      %p142 = scmp.ne.s32.totalorder %s131, %s132
      %p143 = scmp.eq.s32.totalorder %s18, 0
      %p144 = por %p142, %p143
      %p145 = scmp.ne.s32.totalorder %s131, %s132
      %p146 = scmp.eq.s32.totalorder %s19, 1
      %p147 = por %p145, %p146
      %p149 = scmp.ne.s32.totalorder %s132, %s148
      %p150 = scmp.eq.s32.totalorder %s19, 0
      %p151 = por %p149, %p150
      %p152 = scmp.le.s32.totalorder 1, %s13
      %p153 = scmp.lt.s32.totalorder %s13, 3
      %p154 = pnand %p152, %p153
      %p155 = pneg %p154
      // Predicated region
      $region9: #{tpu_custom_call.1} parent=5 // pred_check
        _
      $region10: #{tpu_custom_call.1} parent=5 // pred_check_branch
        %157 = sbr.rel (%p154) target = $region12
      $region11: #{tpu_custom_call.1} parent=5 // pred_region
        %s158 = ssub.s32 %s13, 1
        // Predicated region
        $region13: #{tpu_custom_call.1} parent=11 // pred_check
          %p159 = pneg %p88
        $region14: #{tpu_custom_call.1} parent=11 // pred_check_branch
          %161 = sbr.rel (%p159) target = $region16
        $region15: #{tpu_custom_call.1} parent=11 // pred_region
          %s162 = smul.u32 19, %s25
          %p163 = scmp.lt.s32.totalorder %s162, 18
          %s164 = scalar_select %p163, %s162, 18
          %p165 = scmp.lt.s32.totalorder %s24, 0
          %s166 = scalar_select %p165, %s24, 0
          %s167 = sadd.s32 %s166, %s164
          %s168 = smul.addr %s167, 4
          %s169 = scalar_lea.vmem %s1, %s168
          %s170 = smul.u32 19, %s25
        $region16: #{tpu_custom_call.1} parent=11 // pred_fallthru
          _
      $region12: #{tpu_custom_call.1} parent=5 // pred_fallthru
        _
      %p171 = scmp.lt.s32.totalorder %s13, 2
      // Predicated region
      $region17: #{tpu_custom_call.1} parent=5 // pred_check
        %p172 = pneg %p171
      $region18: #{tpu_custom_call.1} parent=5 // pred_check_branch
        %174 = sbr.rel (%p172) target = $region20
      $region19: #{tpu_custom_call.1} parent=5 // pred_region
        // Predicated region
        $region21: #{tpu_custom_call.1} parent=19 // pred_check
          %p175 = pneg %p54
        $region22: #{tpu_custom_call.1} parent=19 // pred_check_branch
          %177 = sbr.rel (%p175) target = $region24
        $region23: #{tpu_custom_call.1} parent=19 // pred_region
          %s178 = smul.u32 32, %s20
          %s179 = smul.u32 2, %s22
          %p180 = scmp.lt.s32.totalorder %s178, 63
          %s181 = scalar_select %p180, %s178, 63
          %p182 = scmp.lt.s32.totalorder %s179, 1
          %s183 = scalar_select %p182, %s179, 1
          %s184 = smul.addr %s181, 2
          %s185 = sadd.s32 %s183, %s184
          %s186 = smul.addr %s185, 4
          %s187 = scalar_lea.vmem %s0, %s186
          %s188 = smul.u32 32, %s20
          %s189 = smul.u32 2, %s22
        $region24: #{tpu_custom_call.1} parent=19 // pred_fallthru
          _
      $region20: #{tpu_custom_call.1} parent=5 // pred_fallthru
        _
      %p190 = scmp.le.s32.totalorder 1, %s13
      %p191 = scmp.lt.s32.totalorder %s13, 3
      %p192 = pnand %p190, %p191
      %p193 = pneg %p192
      // Predicated region
      $region25: #{tpu_custom_call.1} parent=5 // pred_check
        _
      $region26: #{tpu_custom_call.1} parent=5 // pred_check_branch
        %195 = sbr.rel (%p192) target = $region28
      $region27: #{tpu_custom_call.1} parent=5 // pred_region
        %s196 = ssub.s32 %s13, 1
        %s197 = smul.u32 32, %s23
        %s198 = smul.u32 2, %s25
        %p199 = scmp.lt.s32.totalorder %s197, 63
        %s200 = scalar_select %p199, %s197, 63
        %p201 = scmp.lt.s32.totalorder %s198, 1
        %s202 = scalar_select %p201, %s198, 1
        %s203 = smul.addr %s200, 2
        %s204 = sadd.s32 %s202, %s203
        %s205 = smul.addr %s204, 4
        %s206 = scalar_lea.vmem %s0, %s205
        %p207 = pneg %p60
        %p208 = pneg %p57
        %s209 = smul.u32 19, %s25
        %p210 = scmp.lt.s32.totalorder %s209, 18
        %s211 = scalar_select %p210, %s209, 18
        %p212 = scmp.lt.s32.totalorder %s24, 0
        %s213 = scalar_select %p212, %s24, 0
        %s214 = sadd.s32 %s213, %s211
        %s215 = smul.addr %s214, 4
        %s216 = scalar_lea.vmem %s1, %s215
        %p217 = pneg %p88
        %p218 = pneg %p85
        %p219 = pneg %p116
        %p220 = pneg %p113
        %s221 = smul.u32 32, %s23
        %p222 = scmp.lt.s32.totalorder %s221, 63
        %s223 = scalar_select %p222, %s221, 63
        %p224 = scmp.lt.s32.totalorder %s24, 0
        %s225 = scalar_select %p224, %s24, 0
        %s226 = sadd.s32 %s225, %s223
        %s227 = smul.addr %s226, 4
        %s228 = scalar_lea.vmem %s2, %s227
        %p229 = pneg %p144
        %p230 = pneg %p141
        %s231 = sand.u32 %s131, 1
        %s232 = scalar_lea.sflag [#allocation4], %s231
        %s233 = sand.u32 %s131, 1
        %s234 = smul.addr %s233, 8
        %s235 = scalar_lea.vmem [#allocation3], %s234
        %s236 = smul.u32 32, %s23
        %s237 = smul.u32 2, %s25
        %p238 = scmp.lt.s32.totalorder %s236, 63
        %s239 = scalar_select %p238, %s236, 63
        %p240 = scmp.lt.s32.totalorder %s237, 1
        %s241 = scalar_select %p240, %s237, 1
        %s242 = smul.addr %s239, 2
        %s243 = sadd.s32 %s241, %s242
        %s244 = smul.addr %s243, 4
        %s245 = scalar_lea.vmem %s0, %s244
        %s246 = smul.u32 32, %s23
        %s247 = smul.u32 2, %s25
        %s248 = smul.u32 19, %s25
        %p249 = scmp.lt.s32.totalorder %s248, 18
        %s250 = scalar_select %p249, %s248, 18
        %p251 = scmp.lt.s32.totalorder %s24, 0
        %s252 = scalar_select %p251, %s24, 0
        %s253 = sadd.s32 %s252, %s250
        %s254 = smul.addr %s253, 4
        %s255 = scalar_lea.vmem %s1, %s254
        %s256 = smul.u32 19, %s25
        %s257 = smul.u32 32, %s23
        %p258 = scmp.lt.s32.totalorder %s257, 63
        %s259 = scalar_select %p258, %s257, 63
        %p260 = scmp.lt.s32.totalorder %s24, 0
        %s261 = scalar_select %p260, %s24, 0
        %s262 = sadd.s32 %s261, %s259
        %s263 = smul.addr %s262, 4
        %s264 = scalar_lea.vmem %s2, %s263
        %s265 = smul.u32 32, %s23
        %p267 = scmp.eq.s32.totalorder %s25, 0
        // Predicated region
        $region29: #{tpu_custom_call.1} parent=27 // pred_check
          %p268 = pneg %p267
        $region30: #{tpu_custom_call.1} parent=27 // pred_check_branch
          %270 = sbr.rel (%p268) target = $region32
        $region31: #{tpu_custom_call.1} parent=27 // pred_region
          %vm271 = vcmask 523264
          %272 = vst.msk [vmem:[#allocation2] sm:$0xff] %vm271, 0.0
          %273 = vst.msk [vmem:[#allocation2 + $0x8] sm:$0xff] %vm271, 0.0
          %274 = vst.msk [vmem:[#allocation2 + $0x10] sm:$0xff] %vm271, 0.0
          %275 = vst.msk [vmem:[#allocation2 + $0x18] sm:$0xff] %vm271, 0.0
          %276 = vst.msk [vmem:[#allocation2 + $0x20] sm:$0xff] %vm271, 0.0
          %277 = vst.msk [vmem:[#allocation2 + $0x28] sm:$0xff] %vm271, 0.0
          %278 = vst.msk [vmem:[#allocation2 + $0x30] sm:$0xff] %vm271, 0.0
          %279 = vst.msk [vmem:[#allocation2 + $0x38] sm:$0xff] %vm271, 0.0
          %280 = vst.msk [vmem:[#allocation2 + $0x40] sm:$0xff] %vm271, 0.0
          %281 = vst.msk [vmem:[#allocation2 + $0x48] sm:$0xff] %vm271, 0.0
          %282 = vst.msk [vmem:[#allocation2 + $0x50] sm:$0xff] %vm271, 0.0
          %283 = vst.msk [vmem:[#allocation2 + $0x58] sm:$0xff] %vm271, 0.0
          %284 = vst.msk [vmem:[#allocation2 + $0x60] sm:$0xff] %vm271, 0.0
          %285 = vst.msk [vmem:[#allocation2 + $0x68] sm:$0xff] %vm271, 0.0
          %286 = vst.msk [vmem:[#allocation2 + $0x70] sm:$0xff] %vm271, 0.0
          %287 = vst.msk [vmem:[#allocation2 + $0x78] sm:$0xff] %vm271, 0.0
          %288 = vst.msk [vmem:[#allocation2 + $0x80] sm:$0xff] %vm271, 0.0
          %289 = vst.msk [vmem:[#allocation2 + $0x88] sm:$0xff] %vm271, 0.0
          %290 = vst.msk [vmem:[#allocation2 + $0x90] sm:$0xff] %vm271, 0.0
          %291 = vst.msk [vmem:[#allocation2 + $0x98] sm:$0xff] %vm271, 0.0
          %292 = vst.msk [vmem:[#allocation2 + $0xa0] sm:$0xff] %vm271, 0.0
          %293 = vst.msk [vmem:[#allocation2 + $0xa8] sm:$0xff] %vm271, 0.0
          %294 = vst.msk [vmem:[#allocation2 + $0xb0] sm:$0xff] %vm271, 0.0
          %295 = vst.msk [vmem:[#allocation2 + $0xb8] sm:$0xff] %vm271, 0.0
          %296 = vst.msk [vmem:[#allocation2 + $0xc0] sm:$0xff] %vm271, 0.0
          %297 = vst.msk [vmem:[#allocation2 + $0xc8] sm:$0xff] %vm271, 0.0
          %298 = vst.msk [vmem:[#allocation2 + $0xd0] sm:$0xff] %vm271, 0.0
          %299 = vst.msk [vmem:[#allocation2 + $0xd8] sm:$0xff] %vm271, 0.0
          %300 = vst.msk [vmem:[#allocation2 + $0xe0] sm:$0xff] %vm271, 0.0
          %301 = vst.msk [vmem:[#allocation2 + $0xe8] sm:$0xff] %vm271, 0.0
          %302 = vst.msk [vmem:[#allocation2 + $0xf0] sm:$0xff] %vm271, 0.0
          %303 = vst.msk [vmem:[#allocation2 + $0xf8] sm:$0xff] %vm271, 0.0
        $region32: #{tpu_custom_call.1} parent=27 // pred_fallthru
          _
        %v304 = vld [vmem:[#allocation2] sm:$0xff]
        %v305 = vld [vmem:[#allocation2 + $0x8] sm:$0xff]
        %v306 = vld [vmem:[#allocation2 + $0x10] sm:$0xff]
        %v307 = vld [vmem:[#allocation2 + $0x18] sm:$0xff]
        %v308 = vld [vmem:[#allocation2 + $0x20] sm:$0xff]
        %v309 = vld [vmem:[#allocation2 + $0x28] sm:$0xff]
        %v310 = vld [vmem:[#allocation2 + $0x30] sm:$0xff]
        %v311 = vld [vmem:[#allocation2 + $0x38] sm:$0xff]
        %v312 = vld [vmem:[#allocation2 + $0x40] sm:$0xff]
        %v313 = vld [vmem:[#allocation2 + $0x48] sm:$0xff]
        %v314 = vld [vmem:[#allocation2 + $0x50] sm:$0xff]
        %v315 = vld [vmem:[#allocation2 + $0x58] sm:$0xff]
        %v316 = vld [vmem:[#allocation2 + $0x60] sm:$0xff]
        %v317 = vld [vmem:[#allocation2 + $0x68] sm:$0xff]
        %v318 = vld [vmem:[#allocation2 + $0x70] sm:$0xff]
        %v319 = vld [vmem:[#allocation2 + $0x78] sm:$0xff]
        %v320 = vld [vmem:[#allocation2 + $0x80] sm:$0xff]
        %v321 = vld [vmem:[#allocation2 + $0x88] sm:$0xff]
        %v322 = vld [vmem:[#allocation2 + $0x90] sm:$0xff]
        %v323 = vld [vmem:[#allocation2 + $0x98] sm:$0xff]
        %v324 = vld [vmem:[#allocation2 + $0xa0] sm:$0xff]
        %v325 = vld [vmem:[#allocation2 + $0xa8] sm:$0xff]
        %v326 = vld [vmem:[#allocation2 + $0xb0] sm:$0xff]
        %v327 = vld [vmem:[#allocation2 + $0xb8] sm:$0xff]
        %v328 = vld [vmem:[#allocation2 + $0xc0] sm:$0xff]
        %v329 = vld [vmem:[#allocation2 + $0xc8] sm:$0xff]
        %v330 = vld [vmem:[#allocation2 + $0xd0] sm:$0xff]
        %v331 = vld [vmem:[#allocation2 + $0xd8] sm:$0xff]
        %v332 = vld [vmem:[#allocation2 + $0xe0] sm:$0xff]
        %v333 = vld [vmem:[#allocation2 + $0xe8] sm:$0xff]
        %v334 = vld [vmem:[#allocation2 + $0xf0] sm:$0xff]
        %v335 = vld [vmem:[#allocation2 + $0xf8] sm:$0xff]
        %v336 = vld [vmem:[%s245] sm:$0xff]
        %v337 = vld [vmem:[%s245 + $0x8] sm:$0xff]
        %v338 = vld [vmem:[%s245 + $0x10] sm:$0xff]
        %v339 = vld [vmem:[%s245 + $0x18] sm:$0xff]
        %v340 = vld [vmem:[%s245 + $0x20] sm:$0xff]
        %v341 = vld [vmem:[%s245 + $0x28] sm:$0xff]
        %v342 = vld [vmem:[%s245 + $0x30] sm:$0xff]
        %v343 = vld [vmem:[%s245 + $0x38] sm:$0xff]
        %v344 = vld [vmem:[%s245 + $0x40] sm:$0xff]
        %v345 = vld [vmem:[%s245 + $0x48] sm:$0xff]
        %v346 = vld [vmem:[%s245 + $0x50] sm:$0xff]
        %v347 = vld [vmem:[%s245 + $0x58] sm:$0xff]
        %v348 = vld [vmem:[%s245 + $0x60] sm:$0xff]
        %v349 = vld [vmem:[%s245 + $0x68] sm:$0xff]
        %v350 = vld [vmem:[%s245 + $0x70] sm:$0xff]
        %v351 = vld [vmem:[%s245 + $0x78] sm:$0xff]
        %v352 = vld [vmem:[%s245 + $0x80] sm:$0xff]
        %v353 = vld [vmem:[%s245 + $0x88] sm:$0xff]
        %v354 = vld [vmem:[%s245 + $0x90] sm:$0xff]
        %v355 = vld [vmem:[%s245 + $0x98] sm:$0xff]
        %v356 = vld [vmem:[%s245 + $0xa0] sm:$0xff]
        %v357 = vld [vmem:[%s245 + $0xa8] sm:$0xff]
        %v358 = vld [vmem:[%s245 + $0xb0] sm:$0xff]
        %v359 = vld [vmem:[%s245 + $0xb8] sm:$0xff]
        %v360 = vld [vmem:[%s245 + $0xc0] sm:$0xff]
        %v361 = vld [vmem:[%s245 + $0xc8] sm:$0xff]
        %v362 = vld [vmem:[%s245 + $0xd0] sm:$0xff]
        %v363 = vld [vmem:[%s245 + $0xd8] sm:$0xff]
        %v364 = vld [vmem:[%s245 + $0xe0] sm:$0xff]
        %v365 = vld [vmem:[%s245 + $0xe8] sm:$0xff]
        %v366 = vld [vmem:[%s245 + $0xf0] sm:$0xff]
        %v367 = vld [vmem:[%s245 + $0xf8] sm:$0xff]
        %v368 = vld [vmem:[%s255] sm:$0xf]
        %v369 = vld [vmem:[%s255 + $0x4] sm:$0xf]
        %v370 = vld [vmem:[%s255 + $0x8] sm:$0xf]
        %v371 = vld [vmem:[%s255 + $0xc] sm:$0xf]
        %v372 = vld [vmem:[%s255 + $0x10] sm:$0xf]
        %v373 = vld [vmem:[%s255 + $0x14] sm:$0xf]
        %v374 = vld [vmem:[%s255 + $0x18] sm:$0xf]
        %v375 = vld [vmem:[%s255 + $0x1c] sm:$0xf]
        %v376 = vld [vmem:[%s255 + $0x20] sm:$0xf]
        %v377 = vld [vmem:[%s255 + $0x24] sm:$0xf]
        %v378 = vld [vmem:[%s255 + $0x28] sm:$0xf]
        %v379 = vld [vmem:[%s255 + $0x2c] sm:$0xf]
        %v380 = vld [vmem:[%s255 + $0x30] sm:$0xf]
        %v381 = vld [vmem:[%s255 + $0x34] sm:$0xf]
        %v382 = vld [vmem:[%s255 + $0x38] sm:$0xf]
        %v383 = vld [vmem:[%s255 + $0x3c] sm:$0xf]
        %v384 = vld [vmem:[%s255 + $0x40] sm:$0xf]
        %v385 = vld [vmem:[%s255 + $0x44] sm:$0xf]
        %v386 = vld [vmem:[%s255 + $0x48] sm:$0x3]
        %v419 = vunpack.c.l.b16 %v336
        %v420 = vunpack.c.h.b16 %v336
        %v421 = vunpack.c.l.b16 %v337
        %v422 = vunpack.c.h.b16 %v337
        %v423 = vunpack.c.l.b16 %v338
        %v424 = vunpack.c.h.b16 %v338
        %v425 = vunpack.c.l.b16 %v339
        %v426 = vunpack.c.h.b16 %v339
        %v427 = vunpack.c.l.b16 %v340
        %v428 = vunpack.c.h.b16 %v340
        %v429 = vunpack.c.l.b16 %v341
        %v430 = vunpack.c.h.b16 %v341
        %v431 = vunpack.c.l.b16 %v342
        %v432 = vunpack.c.h.b16 %v342
        %v433 = vunpack.c.l.b16 %v343
        %v434 = vunpack.c.h.b16 %v343
        %v435 = vunpack.c.l.b16 %v344
        %v436 = vunpack.c.h.b16 %v344
        %v437 = vunpack.c.l.b16 %v345
        %v438 = vunpack.c.h.b16 %v345
        %v439 = vunpack.c.l.b16 %v346
        %v440 = vunpack.c.h.b16 %v346
        %v441 = vunpack.c.l.b16 %v347
        %v442 = vunpack.c.h.b16 %v347
        %v443 = vunpack.c.l.b16 %v348
        %v444 = vunpack.c.h.b16 %v348
        %v445 = vunpack.c.l.b16 %v349
        %v446 = vunpack.c.h.b16 %v349
        %v447 = vunpack.c.l.b16 %v350
        %v448 = vunpack.c.h.b16 %v350
        %v449 = vunpack.c.l.b16 %v351
        %v450 = vunpack.c.h.b16 %v351
        %v451 = vunpack.c.l.b16 %v352
        %v452 = vunpack.c.h.b16 %v352
        %v453 = vunpack.c.l.b16 %v353
        %v454 = vunpack.c.h.b16 %v353
        %v455 = vunpack.c.l.b16 %v354
        %v456 = vunpack.c.h.b16 %v354
        %v457 = vunpack.c.l.b16 %v355
        %v458 = vunpack.c.h.b16 %v355
        %v459 = vunpack.c.l.b16 %v356
        %v460 = vunpack.c.h.b16 %v356
        %v461 = vunpack.c.l.b16 %v357
        %v462 = vunpack.c.h.b16 %v357
        %v463 = vunpack.c.l.b16 %v358
        %v464 = vunpack.c.h.b16 %v358
        %v465 = vunpack.c.l.b16 %v359
        %v466 = vunpack.c.h.b16 %v359
        %v467 = vunpack.c.l.b16 %v360
        %v468 = vunpack.c.h.b16 %v360
        %v469 = vunpack.c.l.b16 %v361
        %v470 = vunpack.c.h.b16 %v361
        %v471 = vunpack.c.l.b16 %v362
        %v472 = vunpack.c.h.b16 %v362
        %v473 = vunpack.c.l.b16 %v363
        %v474 = vunpack.c.h.b16 %v363
        %v475 = vunpack.c.l.b16 %v364
        %v476 = vunpack.c.h.b16 %v364
        %v477 = vunpack.c.l.b16 %v365
        %v478 = vunpack.c.h.b16 %v365
        %v479 = vunpack.c.l.b16 %v366
        %v480 = vunpack.c.h.b16 %v366
        %v481 = vunpack.c.l.b16 %v367
        %v482 = vunpack.c.h.b16 %v367
        %v483 = vpack.c.b16 %v421, %v419
        %v484 = vpack.c.b16 %v422, %v420
        %v485 = vpack.c.b16 %v425, %v423
        %v486 = vpack.c.b16 %v426, %v424
        %v487 = vpack.c.b16 %v429, %v427
        %v488 = vpack.c.b16 %v430, %v428
        %v489 = vpack.c.b16 %v433, %v431
        %v490 = vpack.c.b16 %v434, %v432
        %v491 = vpack.c.b16 %v437, %v435
        %v492 = vpack.c.b16 %v438, %v436
        %v493 = vpack.c.b16 %v441, %v439
        %v494 = vpack.c.b16 %v442, %v440
        %v495 = vpack.c.b16 %v445, %v443
        %v496 = vpack.c.b16 %v446, %v444
        %v497 = vpack.c.b16 %v449, %v447
        %v498 = vpack.c.b16 %v450, %v448
        %v499 = vpack.c.b16 %v453, %v451
        %v500 = vpack.c.b16 %v454, %v452
        %v501 = vpack.c.b16 %v457, %v455
        %v502 = vpack.c.b16 %v458, %v456
        %v503 = vpack.c.b16 %v461, %v459
        %v504 = vpack.c.b16 %v462, %v460
        %v505 = vpack.c.b16 %v465, %v463
        %v506 = vpack.c.b16 %v466, %v464
        %v507 = vpack.c.b16 %v469, %v467
        %v508 = vpack.c.b16 %v470, %v468
        %v509 = vpack.c.b16 %v473, %v471
        %v510 = vpack.c.b16 %v474, %v472
        %v511 = vpack.c.b16 %v477, %v475
        %v512 = vpack.c.b16 %v478, %v476
        %v513 = vpack.c.b16 %v481, %v479
        %v514 = vpack.c.b16 %v482, %v480
        %v550 = vunpack.c.l.b16 %v368
        %v551 = vunpack.c.l.b16 %v369
        %v552 = vunpack.c.l.b16 %v370
        %v553 = vunpack.c.l.b16 %v371
        %v554 = vunpack.c.l.b16 %v372
        %v555 = vunpack.c.l.b16 %v373
        %v556 = vunpack.c.l.b16 %v374
        %v557 = vunpack.c.l.b16 %v375
        %v558 = vunpack.c.l.b16 %v376
        %v559 = vunpack.c.l.b16 %v377
        %v560 = vunpack.c.l.b16 %v378
        %v561 = vunpack.c.l.b16 %v379
        %v562 = vunpack.c.l.b16 %v380
        %v563 = vunpack.c.l.b16 %v381
        %v564 = vunpack.c.l.b16 %v382
        %v565 = vunpack.c.l.b16 %v383
        %v566 = vunpack.c.l.b16 %v384
        %v567 = vunpack.c.l.b16 %v385
        %v568 = vunpack.c.l.b16 %v386
        %v569 = vpack.c.b16 %v551, %v550
        %v570 = vpack.c.b16 %v553, %v552
        %v571 = vpack.c.b16 %v555, %v554
        %v572 = vpack.c.b16 %v557, %v556
        %v573 = vpack.c.b16 %v559, %v558
        %v574 = vpack.c.b16 %v561, %v560
        %v575 = vpack.c.b16 %v563, %v562
        %v576 = vpack.c.b16 %v565, %v564
        %v577 = vpack.c.b16 %v567, %v566
        %v578 = vpack.c.b16 %v568, %v568
        %vm588 = vcmask 154624
        %v590 = vsel %vm588, %v484, 0
        %v593 = vsel %vm588, %v486, 0
        %v596 = vsel %vm588, %v488, 0
        %v599 = vsel %vm588, %v490, 0
        %v602 = vsel %vm588, %v492, 0
        %v605 = vsel %vm588, %v494, 0
        %v608 = vsel %vm588, %v496, 0
        %v611 = vsel %vm588, %v498, 0
        %v614 = vsel %vm588, %v500, 0
        %v617 = vsel %vm588, %v502, 0
        %v620 = vsel %vm588, %v504, 0
        %v623 = vsel %vm588, %v506, 0
        %v626 = vsel %vm588, %v508, 0
        %v629 = vsel %vm588, %v510, 0
        %v632 = vsel %vm588, %v512, 0
        %v635 = vsel %vm588, %v514, 0
        %vm637 = vcmask 1040384
        %vm638 = vcmask 1041408
        %v639 = vsel %vm637, 4294967295, 65535
        %v640 = vsel %vm638, %v639, 0
        %v642 = vand.u32 %v578, %v640
        %644 = vmatprep.subr.bf16.mxu0 0
        %645 = vmatpush1.bf16.msra.mxu0 %v569
        %646 = vmatprep.subr.bf16.mxu0 0
        %647 = vmatpush1.bf16.msra.mxu0 %v570
        %648 = vmatprep.subr.bf16.mxu0 0
        %649 = vmatpush1.bf16.msra.mxu0 %v571
        %650 = vmatprep.subr.bf16.mxu0 0
        %651 = vmatpush1.bf16.msra.mxu0 %v572
        %652 = vmatprep.subr.bf16.mxu0 0
        %653 = vmatpush1.bf16.msra.mxu0 %v573
        %654 = vmatprep.subr.bf16.mxu0 0
        %655 = vmatpush1.bf16.msra.mxu0 %v574
        %656 = vmatprep.subr.bf16.mxu0 0
        %657 = vmatpush1.bf16.msra.mxu0 %v575
        %658 = vmatprep.subr.bf16.mxu0 0
        %659 = vmatpush1.bf16.msra.mxu0 %v576
        %660 = vmatprep.subr.bf16.mxu0 0
        %661 = vmatpush1.bf16.msra.mxu0 %v577
        %662 = vmatprep.subr.bf16.mxu0 0
        %663 = vmatpush1.bf16.msra.mxu0 %v642
        %664 = vmatprep.subr.bf16.mxu0 0
        %665 = vmatpush1.bf16.msra.mxu0 0
        %666 = vmatprep.subr.bf16.mxu0 0
        %667 = vmatpush1.bf16.msra.mxu0 0
        %668 = vmatprep.subr.bf16.mxu0 0
        %669 = vmatpush1.bf16.msra.mxu0 0
        %670 = vmatprep.subr.bf16.mxu0 0
        %671 = vmatpush1.bf16.msra.mxu0 0
        %672 = vmatprep.subr.bf16.mxu0 0
        %673 = vmatpush1.bf16.msra.mxu0 0
        %674 = vmatprep.subr.bf16.mxu0 0
        %675 = vmatpush1.bf16.msra.mxu0 0
        %676 = vmatprep.mubr.bf16.mxu0 %v590
        %677 = vmatmul.mubr.bf16.gmra.mrb[0].mxu0 %v483
        %v678 = vpop.f32.mrb[0].mxu0
        %v679 = vadd.f32 0.0, %v678
        %v680 = vpop.f32.mrb[0].mxu0
        %v681 = vpop.f32.mrb[0].mxu0
        %v682 = vadd.f32 0.0, %v681
        %v683 = vpop.f32.mrb[0].mxu0
        %684 = vmatprep.mubr.bf16.mxu0 %v593
        %685 = vmatmul.mubr.bf16.gmra.mrb[0].mxu0 %v485
        %v686 = vpop.f32.mrb[0].mxu0
        %v687 = vadd.f32 0.0, %v686
        %v688 = vpop.f32.mrb[0].mxu0
        %v689 = vpop.f32.mrb[0].mxu0
        %v690 = vadd.f32 0.0, %v689
        %v691 = vpop.f32.mrb[0].mxu0
        %692 = vmatprep.mubr.bf16.mxu0 %v596
        %693 = vmatmul.mubr.bf16.gmra.mrb[0].mxu0 %v487
        %v694 = vpop.f32.mrb[0].mxu0
        %v695 = vadd.f32 0.0, %v694
        %v696 = vpop.f32.mrb[0].mxu0
        %v697 = vpop.f32.mrb[0].mxu0
        %v698 = vadd.f32 0.0, %v697
        %v699 = vpop.f32.mrb[0].mxu0
        %700 = vmatprep.mubr.bf16.mxu0 %v599
        %701 = vmatmul.mubr.bf16.gmra.mrb[0].mxu0 %v489
        %v702 = vpop.f32.mrb[0].mxu0
        %v703 = vadd.f32 0.0, %v702
        %v704 = vpop.f32.mrb[0].mxu0
        %v705 = vpop.f32.mrb[0].mxu0
        %v706 = vadd.f32 0.0, %v705
        %v707 = vpop.f32.mrb[0].mxu0
        %708 = vmatprep.mubr.bf16.mxu0 %v602
        %709 = vmatmul.mubr.bf16.gmra.mrb[0].mxu0 %v491
        %v710 = vpop.f32.mrb[0].mxu0
        %v711 = vadd.f32 0.0, %v710
        %v712 = vpop.f32.mrb[0].mxu0
        %v713 = vpop.f32.mrb[0].mxu0
        %v714 = vadd.f32 0.0, %v713
        %v715 = vpop.f32.mrb[0].mxu0
        %716 = vmatprep.mubr.bf16.mxu0 %v605
        %717 = vmatmul.mubr.bf16.gmra.mrb[0].mxu0 %v493
        %v718 = vpop.f32.mrb[0].mxu0
        %v719 = vadd.f32 0.0, %v718
        %v720 = vpop.f32.mrb[0].mxu0
        %v721 = vpop.f32.mrb[0].mxu0
        %v722 = vadd.f32 0.0, %v721
        %v723 = vpop.f32.mrb[0].mxu0
        %724 = vmatprep.mubr.bf16.mxu0 %v608
        %725 = vmatmul.mubr.bf16.gmra.mrb[0].mxu0 %v495
        %v726 = vpop.f32.mrb[0].mxu0
        %v727 = vadd.f32 0.0, %v726
        %v728 = vpop.f32.mrb[0].mxu0
        %v729 = vpop.f32.mrb[0].mxu0
        %v730 = vadd.f32 0.0, %v729
        %v731 = vpop.f32.mrb[0].mxu0
        %732 = vmatprep.mubr.bf16.mxu0 %v611
        %733 = vmatmul.mubr.bf16.gmra.mrb[0].mxu0 %v497
        %v734 = vpop.f32.mrb[0].mxu0
        %v735 = vadd.f32 0.0, %v734
        %v736 = vpop.f32.mrb[0].mxu0
        %v737 = vpop.f32.mrb[0].mxu0
        %v738 = vadd.f32 0.0, %v737
        %v739 = vpop.f32.mrb[0].mxu0
        %740 = vmatprep.mubr.bf16.mxu0 %v614
        %741 = vmatmul.mubr.bf16.gmra.mrb[0].mxu0 %v499
        %v742 = vpop.f32.mrb[0].mxu0
        %v743 = vadd.f32 0.0, %v742
        %v744 = vpop.f32.mrb[0].mxu0
        %v745 = vpop.f32.mrb[0].mxu0
        %v746 = vadd.f32 0.0, %v745
        %v747 = vpop.f32.mrb[0].mxu0
        %748 = vmatprep.mubr.bf16.mxu0 %v617
        %749 = vmatmul.mubr.bf16.gmra.mrb[0].mxu0 %v501
        %v750 = vpop.f32.mrb[0].mxu0
        %v751 = vadd.f32 0.0, %v750
        %v752 = vpop.f32.mrb[0].mxu0
        %v753 = vpop.f32.mrb[0].mxu0
        %v754 = vadd.f32 0.0, %v753
        %v755 = vpop.f32.mrb[0].mxu0
        %756 = vmatprep.mubr.bf16.mxu0 %v620
        %757 = vmatmul.mubr.bf16.gmra.mrb[0].mxu0 %v503
        %v758 = vpop.f32.mrb[0].mxu0
        %v759 = vadd.f32 0.0, %v758
        %v760 = vpop.f32.mrb[0].mxu0
        %v761 = vpop.f32.mrb[0].mxu0
        %v762 = vadd.f32 0.0, %v761
        %v763 = vpop.f32.mrb[0].mxu0
        %764 = vmatprep.mubr.bf16.mxu0 %v623
        %765 = vmatmul.mubr.bf16.gmra.mrb[0].mxu0 %v505
        %v766 = vpop.f32.mrb[0].mxu0
        %v767 = vadd.f32 0.0, %v766
        %v768 = vpop.f32.mrb[0].mxu0
        %v769 = vpop.f32.mrb[0].mxu0
        %v770 = vadd.f32 0.0, %v769
        %v771 = vpop.f32.mrb[0].mxu0
        %772 = vmatprep.mubr.bf16.mxu0 %v626
        %773 = vmatmul.mubr.bf16.gmra.mrb[0].mxu0 %v507
        %v774 = vpop.f32.mrb[0].mxu0
        %v775 = vadd.f32 0.0, %v774
        %v776 = vpop.f32.mrb[0].mxu0
        %v777 = vpop.f32.mrb[0].mxu0
        %v778 = vadd.f32 0.0, %v777
        %v779 = vpop.f32.mrb[0].mxu0
        %780 = vmatprep.mubr.bf16.mxu0 %v629
        %781 = vmatmul.mubr.bf16.gmra.mrb[0].mxu0 %v509
        %v782 = vpop.f32.mrb[0].mxu0
        %v783 = vadd.f32 0.0, %v782
        %v784 = vpop.f32.mrb[0].mxu0
        %v785 = vpop.f32.mrb[0].mxu0
        %v786 = vadd.f32 0.0, %v785
        %v787 = vpop.f32.mrb[0].mxu0
        %788 = vmatprep.mubr.bf16.mxu0 %v632
        %789 = vmatmul.mubr.bf16.gmra.mrb[0].mxu0 %v511
        %v790 = vpop.f32.mrb[0].mxu0
        %v791 = vadd.f32 0.0, %v790
        %v792 = vpop.f32.mrb[0].mxu0
        %v793 = vpop.f32.mrb[0].mxu0
        %v794 = vadd.f32 0.0, %v793
        %v795 = vpop.f32.mrb[0].mxu0
        %796 = vmatprep.mubr.bf16.mxu0 %v635
        %797 = vmatmul.mubr.bf16.gmra.mrb[0].mxu0 %v513
        %v798 = vpop.f32.mrb[0].mxu0
        %v799 = vadd.f32 0.0, %v798
        %v800 = vpop.f32.mrb[0].mxu0
        %v801 = vpop.f32.mrb[0].mxu0
        %v802 = vadd.f32 0.0, %v801
        %v803 = vpop.f32.mrb[0].mxu0
        %804 = vdwg.mxu0
        %v805 = vadd.f32 %v304, %v679
        %v806 = vadd.f32 %v305, %v682
        %v807 = vadd.f32 %v306, %v687
        %v808 = vadd.f32 %v307, %v690
        %v809 = vadd.f32 %v308, %v695
        %v810 = vadd.f32 %v309, %v698
        %v811 = vadd.f32 %v310, %v703
        %v812 = vadd.f32 %v311, %v706
        %v813 = vadd.f32 %v312, %v711
        %v814 = vadd.f32 %v313, %v714
        %v815 = vadd.f32 %v314, %v719
        %v816 = vadd.f32 %v315, %v722
        %v817 = vadd.f32 %v316, %v727
        %v818 = vadd.f32 %v317, %v730
        %v819 = vadd.f32 %v318, %v735
        %v820 = vadd.f32 %v319, %v738
        %v821 = vadd.f32 %v320, %v743
        %v822 = vadd.f32 %v321, %v746
        %v823 = vadd.f32 %v322, %v751
        %v824 = vadd.f32 %v323, %v754
        %v825 = vadd.f32 %v324, %v759
        %v826 = vadd.f32 %v325, %v762
        %v827 = vadd.f32 %v326, %v767
        %v828 = vadd.f32 %v327, %v770
        %v829 = vadd.f32 %v328, %v775
        %v830 = vadd.f32 %v329, %v778
        %v831 = vadd.f32 %v330, %v783
        %v832 = vadd.f32 %v331, %v786
        %v833 = vadd.f32 %v332, %v791
        %v834 = vadd.f32 %v333, %v794
        %v835 = vadd.f32 %v334, %v799
        %v836 = vadd.f32 %v335, %v802
        %vm837 = vcmask 523264
        %838 = vst.msk [vmem:[#allocation2] sm:$0xff] %vm837, %v805
        %839 = vst.msk [vmem:[#allocation2 + $0x8] sm:$0xff] %vm837, %v806
        %840 = vst.msk [vmem:[#allocation2 + $0x10] sm:$0xff] %vm837, %v807
        %841 = vst.msk [vmem:[#allocation2 + $0x18] sm:$0xff] %vm837, %v808
        %842 = vst.msk [vmem:[#allocation2 + $0x20] sm:$0xff] %vm837, %v809
        %843 = vst.msk [vmem:[#allocation2 + $0x28] sm:$0xff] %vm837, %v810
        %844 = vst.msk [vmem:[#allocation2 + $0x30] sm:$0xff] %vm837, %v811
        %845 = vst.msk [vmem:[#allocation2 + $0x38] sm:$0xff] %vm837, %v812
        %846 = vst.msk [vmem:[#allocation2 + $0x40] sm:$0xff] %vm837, %v813
        %847 = vst.msk [vmem:[#allocation2 + $0x48] sm:$0xff] %vm837, %v814
        %848 = vst.msk [vmem:[#allocation2 + $0x50] sm:$0xff] %vm837, %v815
        %849 = vst.msk [vmem:[#allocation2 + $0x58] sm:$0xff] %vm837, %v816
        %850 = vst.msk [vmem:[#allocation2 + $0x60] sm:$0xff] %vm837, %v817
        %851 = vst.msk [vmem:[#allocation2 + $0x68] sm:$0xff] %vm837, %v818
        %852 = vst.msk [vmem:[#allocation2 + $0x70] sm:$0xff] %vm837, %v819
        %853 = vst.msk [vmem:[#allocation2 + $0x78] sm:$0xff] %vm837, %v820
        %854 = vst.msk [vmem:[#allocation2 + $0x80] sm:$0xff] %vm837, %v821
        %855 = vst.msk [vmem:[#allocation2 + $0x88] sm:$0xff] %vm837, %v822
        %856 = vst.msk [vmem:[#allocation2 + $0x90] sm:$0xff] %vm837, %v823
        %857 = vst.msk [vmem:[#allocation2 + $0x98] sm:$0xff] %vm837, %v824
        %858 = vst.msk [vmem:[#allocation2 + $0xa0] sm:$0xff] %vm837, %v825
        %859 = vst.msk [vmem:[#allocation2 + $0xa8] sm:$0xff] %vm837, %v826
        %860 = vst.msk [vmem:[#allocation2 + $0xb0] sm:$0xff] %vm837, %v827
        %861 = vst.msk [vmem:[#allocation2 + $0xb8] sm:$0xff] %vm837, %v828
        %862 = vst.msk [vmem:[#allocation2 + $0xc0] sm:$0xff] %vm837, %v829
        %863 = vst.msk [vmem:[#allocation2 + $0xc8] sm:$0xff] %vm837, %v830
        %864 = vst.msk [vmem:[#allocation2 + $0xd0] sm:$0xff] %vm837, %v831
        %865 = vst.msk [vmem:[#allocation2 + $0xd8] sm:$0xff] %vm837, %v832
        %866 = vst.msk [vmem:[#allocation2 + $0xe0] sm:$0xff] %vm837, %v833
        %867 = vst.msk [vmem:[#allocation2 + $0xe8] sm:$0xff] %vm837, %v834
        %868 = vst.msk [vmem:[#allocation2 + $0xf0] sm:$0xff] %vm837, %v835
        %869 = vst.msk [vmem:[#allocation2 + $0xf8] sm:$0xff] %vm837, %v836
        // Predicated region
        $region33: #{tpu_custom_call.1} parent=27 // pred_check
          %p870 = pneg %p267
        $region34: #{tpu_custom_call.1} parent=27 // pred_check_branch
          %872 = sbr.rel (%p870) target = $region36
        $region35: #{tpu_custom_call.1} parent=27 // pred_region
          %v873 = vld [vmem:[#allocation2] sm:$0xff]
          %v874 = vld [vmem:[#allocation2 + $0x8] sm:$0xff]
          %v875 = vld [vmem:[#allocation2 + $0x10] sm:$0xff]
          %v876 = vld [vmem:[#allocation2 + $0x18] sm:$0xff]
          %v877 = vld [vmem:[#allocation2 + $0x20] sm:$0xff]
          %v878 = vld [vmem:[#allocation2 + $0x28] sm:$0xff]
          %v879 = vld [vmem:[#allocation2 + $0x30] sm:$0xff]
          %v880 = vld [vmem:[#allocation2 + $0x38] sm:$0xff]
          %v881 = vld [vmem:[#allocation2 + $0x40] sm:$0xff]
          %v882 = vld [vmem:[#allocation2 + $0x48] sm:$0xff]
          %v883 = vld [vmem:[#allocation2 + $0x50] sm:$0xff]
          %v884 = vld [vmem:[#allocation2 + $0x58] sm:$0xff]
          %v885 = vld [vmem:[#allocation2 + $0x60] sm:$0xff]
          %v886 = vld [vmem:[#allocation2 + $0x68] sm:$0xff]
          %v887 = vld [vmem:[#allocation2 + $0x70] sm:$0xff]
          %v888 = vld [vmem:[#allocation2 + $0x78] sm:$0xff]
          %v889 = vld [vmem:[#allocation2 + $0x80] sm:$0xff]
          %v890 = vld [vmem:[#allocation2 + $0x88] sm:$0xff]
          %v891 = vld [vmem:[#allocation2 + $0x90] sm:$0xff]
          %v892 = vld [vmem:[#allocation2 + $0x98] sm:$0xff]
          %v893 = vld [vmem:[#allocation2 + $0xa0] sm:$0xff]
          %v894 = vld [vmem:[#allocation2 + $0xa8] sm:$0xff]
          %v895 = vld [vmem:[#allocation2 + $0xb0] sm:$0xff]
          %v896 = vld [vmem:[#allocation2 + $0xb8] sm:$0xff]
          %v897 = vld [vmem:[#allocation2 + $0xc0] sm:$0xff]
          %v898 = vld [vmem:[#allocation2 + $0xc8] sm:$0xff]
          %v899 = vld [vmem:[#allocation2 + $0xd0] sm:$0xff]
          %v900 = vld [vmem:[#allocation2 + $0xd8] sm:$0xff]
          %v901 = vld [vmem:[#allocation2 + $0xe0] sm:$0xff]
          %v902 = vld [vmem:[#allocation2 + $0xe8] sm:$0xff]
          %v903 = vld [vmem:[#allocation2 + $0xf0] sm:$0xff]
          %v904 = vld [vmem:[#allocation2 + $0xf8] sm:$0xff]
          %v905 = vpack.c.bf16 %v874, %v873
          %v906 = vpack.c.bf16 %v876, %v875
          %v907 = vpack.c.bf16 %v878, %v877
          %v908 = vpack.c.bf16 %v880, %v879
          %v909 = vpack.c.bf16 %v882, %v881
          %v910 = vpack.c.bf16 %v884, %v883
          %v911 = vpack.c.bf16 %v886, %v885
          %v912 = vpack.c.bf16 %v888, %v887
          %v913 = vpack.c.bf16 %v890, %v889
          %v914 = vpack.c.bf16 %v892, %v891
          %v915 = vpack.c.bf16 %v894, %v893
          %v916 = vpack.c.bf16 %v896, %v895
          %v917 = vpack.c.bf16 %v898, %v897
          %v918 = vpack.c.bf16 %v900, %v899
          %v919 = vpack.c.bf16 %v902, %v901
          %v920 = vpack.c.bf16 %v904, %v903
          %v937 = vunpack.c.l.b16 %v905
          %v938 = vunpack.c.h.b16 %v905
          %v939 = vunpack.c.l.b16 %v906
          %v940 = vunpack.c.h.b16 %v906
          %v941 = vunpack.c.l.b16 %v907
          %v942 = vunpack.c.h.b16 %v907
          %v943 = vunpack.c.l.b16 %v908
          %v944 = vunpack.c.h.b16 %v908
          %v945 = vunpack.c.l.b16 %v909
          %v946 = vunpack.c.h.b16 %v909
          %v947 = vunpack.c.l.b16 %v910
          %v948 = vunpack.c.h.b16 %v910
          %v949 = vunpack.c.l.b16 %v911
          %v950 = vunpack.c.h.b16 %v911
          %v951 = vunpack.c.l.b16 %v912
          %v952 = vunpack.c.h.b16 %v912
          %v953 = vunpack.c.l.b16 %v913
          %v954 = vunpack.c.h.b16 %v913
          %v955 = vunpack.c.l.b16 %v914
          %v956 = vunpack.c.h.b16 %v914
          %v957 = vunpack.c.l.b16 %v915
          %v958 = vunpack.c.h.b16 %v915
          %v959 = vunpack.c.l.b16 %v916
          %v960 = vunpack.c.h.b16 %v916
          %v961 = vunpack.c.l.b16 %v917
          %v962 = vunpack.c.h.b16 %v917
          %v963 = vunpack.c.l.b16 %v918
          %v964 = vunpack.c.h.b16 %v918
          %v965 = vunpack.c.l.b16 %v919
          %v966 = vunpack.c.h.b16 %v919
          %v967 = vunpack.c.l.b16 %v920
          %v968 = vunpack.c.h.b16 %v920
          %v969 = vpack.c.b16 %v937, %v937
          %v970 = vpack.c.b16 %v938, %v938
          %v971 = vpack.c.b16 %v939, %v939
          %v972 = vpack.c.b16 %v940, %v940
          %v973 = vpack.c.b16 %v941, %v941
          %v974 = vpack.c.b16 %v942, %v942
          %v975 = vpack.c.b16 %v943, %v943
          %v976 = vpack.c.b16 %v944, %v944
          %v977 = vpack.c.b16 %v945, %v945
          %v978 = vpack.c.b16 %v946, %v946
          %v979 = vpack.c.b16 %v947, %v947
          %v980 = vpack.c.b16 %v948, %v948
          %v981 = vpack.c.b16 %v949, %v949
          %v982 = vpack.c.b16 %v950, %v950
          %v983 = vpack.c.b16 %v951, %v951
          %v984 = vpack.c.b16 %v952, %v952
          %v985 = vpack.c.b16 %v953, %v953
          %v986 = vpack.c.b16 %v954, %v954
          %v987 = vpack.c.b16 %v955, %v955
          %v988 = vpack.c.b16 %v956, %v956
          %v989 = vpack.c.b16 %v957, %v957
          %v990 = vpack.c.b16 %v958, %v958
          %v991 = vpack.c.b16 %v959, %v959
          %v992 = vpack.c.b16 %v960, %v960
          %v993 = vpack.c.b16 %v961, %v961
          %v994 = vpack.c.b16 %v962, %v962
          %v995 = vpack.c.b16 %v963, %v963
          %v996 = vpack.c.b16 %v964, %v964
          %v997 = vpack.c.b16 %v965, %v965
          %v998 = vpack.c.b16 %v966, %v966
          %v999 = vpack.c.b16 %v967, %v967
          %v1000 = vpack.c.b16 %v968, %v968
          %vm1033 = vcmask 519168
          %1034 = vst.msk [vmem:[%s264] sm:$0xf] %vm1033, %v969
          %1035 = vst.msk [vmem:[%s264 + $0x4] sm:$0xf] %vm1033, %v970
          %1036 = vst.msk [vmem:[%s264 + $0x8] sm:$0xf] %vm1033, %v971
          %1037 = vst.msk [vmem:[%s264 + $0xc] sm:$0xf] %vm1033, %v972
          %1038 = vst.msk [vmem:[%s264 + $0x10] sm:$0xf] %vm1033, %v973
          %1039 = vst.msk [vmem:[%s264 + $0x14] sm:$0xf] %vm1033, %v974
          %1040 = vst.msk [vmem:[%s264 + $0x18] sm:$0xf] %vm1033, %v975
          %1041 = vst.msk [vmem:[%s264 + $0x1c] sm:$0xf] %vm1033, %v976
          %1042 = vst.msk [vmem:[%s264 + $0x20] sm:$0xf] %vm1033, %v977
          %1043 = vst.msk [vmem:[%s264 + $0x24] sm:$0xf] %vm1033, %v978
          %1044 = vst.msk [vmem:[%s264 + $0x28] sm:$0xf] %vm1033, %v979
          %1045 = vst.msk [vmem:[%s264 + $0x2c] sm:$0xf] %vm1033, %v980
          %1046 = vst.msk [vmem:[%s264 + $0x30] sm:$0xf] %vm1033, %v981
          %1047 = vst.msk [vmem:[%s264 + $0x34] sm:$0xf] %vm1033, %v982
          %1048 = vst.msk [vmem:[%s264 + $0x38] sm:$0xf] %vm1033, %v983
          %1049 = vst.msk [vmem:[%s264 + $0x3c] sm:$0xf] %vm1033, %v984
          %1050 = vst.msk [vmem:[%s264 + $0x40] sm:$0xf] %vm1033, %v985
          %1051 = vst.msk [vmem:[%s264 + $0x44] sm:$0xf] %vm1033, %v986
          %1052 = vst.msk [vmem:[%s264 + $0x48] sm:$0xf] %vm1033, %v987
          %1053 = vst.msk [vmem:[%s264 + $0x4c] sm:$0xf] %vm1033, %v988
          %1054 = vst.msk [vmem:[%s264 + $0x50] sm:$0xf] %vm1033, %v989
          %1055 = vst.msk [vmem:[%s264 + $0x54] sm:$0xf] %vm1033, %v990
          %1056 = vst.msk [vmem:[%s264 + $0x58] sm:$0xf] %vm1033, %v991
          %1057 = vst.msk [vmem:[%s264 + $0x5c] sm:$0xf] %vm1033, %v992
          %1058 = vst.msk [vmem:[%s264 + $0x60] sm:$0xf] %vm1033, %v993
          %1059 = vst.msk [vmem:[%s264 + $0x64] sm:$0xf] %vm1033, %v994
          %1060 = vst.msk [vmem:[%s264 + $0x68] sm:$0xf] %vm1033, %v995
          %1061 = vst.msk [vmem:[%s264 + $0x6c] sm:$0xf] %vm1033, %v996
          %1062 = vst.msk [vmem:[%s264 + $0x70] sm:$0xf] %vm1033, %v997
          %1063 = vst.msk [vmem:[%s264 + $0x74] sm:$0xf] %vm1033, %v998
          %1064 = vst.msk [vmem:[%s264 + $0x78] sm:$0xf] %vm1033, %v999
          %1065 = vst.msk [vmem:[%s264 + $0x7c] sm:$0xf] %vm1033, %v1000
          %v1066 = vsel %vm837, %v873, 0.0
          %v1067 = vsel %vm837, %v874, 0.0
          %v1068 = vadd.f32 %v1066, %v1067
          %v1069 = vsel %vm837, %v875, 0.0
          %v1070 = vadd.f32 %v1068, %v1069
          %v1071 = vsel %vm837, %v876, 0.0
          %v1072 = vadd.f32 %v1070, %v1071
          %v1073 = vsel %vm837, %v877, 0.0
          %v1074 = vadd.f32 %v1072, %v1073
          %v1075 = vsel %vm837, %v878, 0.0
          %v1076 = vadd.f32 %v1074, %v1075
          %v1077 = vsel %vm837, %v879, 0.0
          %v1078 = vadd.f32 %v1076, %v1077
          %v1079 = vsel %vm837, %v880, 0.0
          %v1080 = vadd.f32 %v1078, %v1079
          %v1081 = vsel %vm837, %v881, 0.0
          %v1082 = vadd.f32 %v1080, %v1081
          %v1083 = vsel %vm837, %v882, 0.0
          %v1084 = vadd.f32 %v1082, %v1083
          %v1085 = vsel %vm837, %v883, 0.0
          %v1086 = vadd.f32 %v1084, %v1085
          %v1087 = vsel %vm837, %v884, 0.0
          %v1088 = vadd.f32 %v1086, %v1087
          %v1089 = vsel %vm837, %v885, 0.0
          %v1090 = vadd.f32 %v1088, %v1089
          %v1091 = vsel %vm837, %v886, 0.0
          %v1092 = vadd.f32 %v1090, %v1091
          %v1093 = vsel %vm837, %v887, 0.0
          %v1094 = vadd.f32 %v1092, %v1093
          %v1095 = vsel %vm837, %v888, 0.0
          %v1096 = vadd.f32 %v1094, %v1095
          %v1097 = vsel %vm837, %v889, 0.0
          %v1098 = vadd.f32 %v1096, %v1097
          %v1099 = vsel %vm837, %v890, 0.0
          %v1100 = vadd.f32 %v1098, %v1099
          %v1101 = vsel %vm837, %v891, 0.0
          %v1102 = vadd.f32 %v1100, %v1101
          %v1103 = vsel %vm837, %v892, 0.0
          %v1104 = vadd.f32 %v1102, %v1103
          %v1105 = vsel %vm837, %v893, 0.0
          %v1106 = vadd.f32 %v1104, %v1105
          %v1107 = vsel %vm837, %v894, 0.0
          %v1108 = vadd.f32 %v1106, %v1107
          %v1109 = vsel %vm837, %v895, 0.0
          %v1110 = vadd.f32 %v1108, %v1109
          %v1111 = vsel %vm837, %v896, 0.0
          %v1112 = vadd.f32 %v1110, %v1111
          %v1113 = vsel %vm837, %v897, 0.0
          %v1114 = vadd.f32 %v1112, %v1113
          %v1115 = vsel %vm837, %v898, 0.0
          %v1116 = vadd.f32 %v1114, %v1115
          %v1117 = vsel %vm837, %v899, 0.0
          %v1118 = vadd.f32 %v1116, %v1117
          %v1119 = vsel %vm837, %v900, 0.0
          %v1120 = vadd.f32 %v1118, %v1119
          %v1121 = vsel %vm837, %v901, 0.0
          %v1122 = vadd.f32 %v1120, %v1121
          %v1123 = vsel %vm837, %v902, 0.0
          %v1124 = vadd.f32 %v1122, %v1123
          %v1125 = vsel %vm837, %v903, 0.0
          %v1126 = vadd.f32 %v1124, %v1125
          %v1127 = vsel %vm837, %v904, 0.0
          %v1128 = vadd.f32 %v1126, %v1127
          %v1129 = vrot.slane %v1128, 4
          %v1130 = vadd.f32 %v1128, %v1129
          %v1131 = vrot.slane %v1130, 2
          %v1132 = vadd.f32 %v1130, %v1131
          %v1133 = vrot.slane %v1132, 1
          %v1134 = vadd.f32 %v1132, %v1133
          %v1135 = vmul.f32 %v873, %v873
          %v1136 = vmul.f32 %v874, %v874
          %v1137 = vmul.f32 %v875, %v875
          %v1138 = vmul.f32 %v876, %v876
          %v1139 = vmul.f32 %v877, %v877
          %v1140 = vmul.f32 %v878, %v878
          %v1141 = vmul.f32 %v879, %v879
          %v1142 = vmul.f32 %v880, %v880
          %v1143 = vmul.f32 %v881, %v881
          %v1144 = vmul.f32 %v882, %v882
          %v1145 = vmul.f32 %v883, %v883
          %v1146 = vmul.f32 %v884, %v884
          %v1147 = vmul.f32 %v885, %v885
          %v1148 = vmul.f32 %v886, %v886
          %v1149 = vmul.f32 %v887, %v887
          %v1150 = vmul.f32 %v888, %v888
          %v1151 = vmul.f32 %v889, %v889
          %v1152 = vmul.f32 %v890, %v890
          %v1153 = vmul.f32 %v891, %v891
          %v1154 = vmul.f32 %v892, %v892
          %v1155 = vmul.f32 %v893, %v893
          %v1156 = vmul.f32 %v894, %v894
          %v1157 = vmul.f32 %v895, %v895
          %v1158 = vmul.f32 %v896, %v896
          %v1159 = vmul.f32 %v897, %v897
          %v1160 = vmul.f32 %v898, %v898
          %v1161 = vmul.f32 %v899, %v899
          %v1162 = vmul.f32 %v900, %v900
          %v1163 = vmul.f32 %v901, %v901
          %v1164 = vmul.f32 %v902, %v902
          %v1165 = vmul.f32 %v903, %v903
          %v1166 = vmul.f32 %v904, %v904
          %v1167 = vsel %vm837, %v1135, 0.0
          %v1168 = vsel %vm837, %v1136, 0.0
          %v1169 = vadd.f32 %v1167, %v1168
          %v1170 = vsel %vm837, %v1137, 0.0
          %v1171 = vadd.f32 %v1169, %v1170
          %v1172 = vsel %vm837, %v1138, 0.0
          %v1173 = vadd.f32 %v1171, %v1172
          %v1174 = vsel %vm837, %v1139, 0.0
          %v1175 = vadd.f32 %v1173, %v1174
          %v1176 = vsel %vm837, %v1140, 0.0
          %v1177 = vadd.f32 %v1175, %v1176
          %v1178 = vsel %vm837, %v1141, 0.0
          %v1179 = vadd.f32 %v1177, %v1178
          %v1180 = vsel %vm837, %v1142, 0.0
          %v1181 = vadd.f32 %v1179, %v1180
          %v1182 = vsel %vm837, %v1143, 0.0
          %v1183 = vadd.f32 %v1181, %v1182
          %v1184 = vsel %vm837, %v1144, 0.0
          %v1185 = vadd.f32 %v1183, %v1184
          %v1186 = vsel %vm837, %v1145, 0.0
          %v1187 = vadd.f32 %v1185, %v1186
          %v1188 = vsel %vm837, %v1146, 0.0
          %v1189 = vadd.f32 %v1187, %v1188
          %v1190 = vsel %vm837, %v1147, 0.0
          %v1191 = vadd.f32 %v1189, %v1190
          %v1192 = vsel %vm837, %v1148, 0.0
          %v1193 = vadd.f32 %v1191, %v1192
          %v1194 = vsel %vm837, %v1149, 0.0
          %v1195 = vadd.f32 %v1193, %v1194
          %v1196 = vsel %vm837, %v1150, 0.0
          %v1197 = vadd.f32 %v1195, %v1196
          %v1198 = vsel %vm837, %v1151, 0.0
          %v1199 = vadd.f32 %v1197, %v1198
          %v1200 = vsel %vm837, %v1152, 0.0
          %v1201 = vadd.f32 %v1199, %v1200
          %v1202 = vsel %vm837, %v1153, 0.0
          %v1203 = vadd.f32 %v1201, %v1202
          %v1204 = vsel %vm837, %v1154, 0.0
          %v1205 = vadd.f32 %v1203, %v1204
          %v1206 = vsel %vm837, %v1155, 0.0
          %v1207 = vadd.f32 %v1205, %v1206
          %v1208 = vsel %vm837, %v1156, 0.0
          %v1209 = vadd.f32 %v1207, %v1208
          %v1210 = vsel %vm837, %v1157, 0.0
          %v1211 = vadd.f32 %v1209, %v1210
          %v1212 = vsel %vm837, %v1158, 0.0
          %v1213 = vadd.f32 %v1211, %v1212
          %v1214 = vsel %vm837, %v1159, 0.0
          %v1215 = vadd.f32 %v1213, %v1214
          %v1216 = vsel %vm837, %v1160, 0.0
          %v1217 = vadd.f32 %v1215, %v1216
          %v1218 = vsel %vm837, %v1161, 0.0
          %v1219 = vadd.f32 %v1217, %v1218
          %v1220 = vsel %vm837, %v1162, 0.0
          %v1221 = vadd.f32 %v1219, %v1220
          %v1222 = vsel %vm837, %v1163, 0.0
          %v1223 = vadd.f32 %v1221, %v1222
          %v1224 = vsel %vm837, %v1164, 0.0
          %v1225 = vadd.f32 %v1223, %v1224
          %v1226 = vsel %vm837, %v1165, 0.0
          %v1227 = vadd.f32 %v1225, %v1226
          %v1228 = vsel %vm837, %v1166, 0.0
          %v1229 = vadd.f32 %v1227, %v1228
          %v1230 = vrot.slane %v1229, 4
          %v1231 = vadd.f32 %v1229, %v1230
          %v1232 = vrot.slane %v1231, 2
          %v1233 = vadd.f32 %v1231, %v1232
          %v1234 = vrot.slane %v1233, 1
          %v1235 = vadd.f32 %v1233, %v1234
          %v1236 = vlaneseq
          %v1237 = vshrl.u32 %v1236, 7
          %vm1238 = vcmp.eq.s32.totalorder %v1237, 0
          %vm1239 = vcmp.eq.s32.totalorder %v1237, 1
          %v1240 = vsel %vm1239, %v1235, 0.0
          %v1241 = vsel %vm1238, %v1134, %v1240
          %1242 = vst.msk [vmem:[%s235] sm:$0xff] %vm837, %v1241
        $region36: #{tpu_custom_call.1} parent=27 // pred_fallthru
          _
        %s1243 = smul.u32 32, %s23
        %p1244 = scmp.lt.s32.totalorder %s1243, 63
        %s1245 = scalar_select %p1244, %s1243, 63
        %p1246 = scmp.lt.s32.totalorder %s24, 0
        %s1247 = scalar_select %p1246, %s24, 0
        %s1248 = sadd.s32 %s1247, %s1245
        %s1249 = smul.addr %s1248, 4
        %s1250 = scalar_lea.vmem %s2, %s1249
        %s1251 = sand.u32 %s131, 1
        %s1252 = scalar_lea.sflag [#allocation4], %s1251
        %s1253 = sand.u32 %s131, 1
        %s1254 = smul.addr %s1253, 8
        %s1255 = scalar_lea.vmem [#allocation3], %s1254
        // Predicated region
        $region37: #{tpu_custom_call.1} parent=27 // pred_check
          %p1256 = pneg %p113
        $region38: #{tpu_custom_call.1} parent=27 // pred_check_branch
          %1258 = sbr.rel (%p1256) target = $region40
        $region39: #{tpu_custom_call.1} parent=27 // pred_region
          %s1259 = smul.u32 32, %s23
        $region40: #{tpu_custom_call.1} parent=27 // pred_fallthru
          _
        // Predicated region
        $region41: #{tpu_custom_call.1} parent=27 // pred_check
          %p1260 = pneg %p141
        $region42: #{tpu_custom_call.1} parent=27 // pred_check_branch
          %1262 = sbr.rel (%p1260) target = $region44
        $region43: #{tpu_custom_call.1} parent=27 // pred_region
          %s1264 = ssub.s32 128, 128
          %1265 = vsyncadd %s1252, %s1264
          %s1266 = sadd.s32 %s24, %s23
          %s1267 = smul.addr %s1266, 128
          %s1268 = scalar_lea.hbm %s3, %s1267
          %s1270 = sshll.u32 %s1255, 4
          %s1271 = int_to_ptr.vmem [resolvable:$true] %s1270
          %1273 = dma.vmem_to_hbm [thread:$0]  %s1271, 128, %s1268, %s1252
        $region44: #{tpu_custom_call.1} parent=27 // pred_fallthru
          _
      $region28: #{tpu_custom_call.1} parent=5 // pred_fallthru
        _
      %p1274 = scmp.le.s32.totalorder 2, %s13
      // Predicated region
      $region45: #{tpu_custom_call.1} parent=5 // pred_check
        %p1275 = pneg %p1274
      $region46: #{tpu_custom_call.1} parent=5 // pred_check_branch
        %1277 = sbr.rel (%p1275) target = $region48
      $region47: #{tpu_custom_call.1} parent=5 // pred_region
        %s1278 = ssub.s32 %s13, 2
        // Predicated region
        $region49: #{tpu_custom_call.1} parent=47 // pred_check
          %p1279 = pneg %p119
        $region50: #{tpu_custom_call.1} parent=47 // pred_check_branch
          %1281 = sbr.rel (%p1279) target = $region52
        $region51: #{tpu_custom_call.1} parent=47 // pred_region
          %s1282 = smul.u32 32, %s26
          %p1283 = scmp.lt.s32.totalorder %s1282, 63
          %s1284 = scalar_select %p1283, %s1282, 63
          %p1285 = scmp.lt.s32.totalorder %s27, 0
          %s1286 = scalar_select %p1285, %s27, 0
          %s1287 = sadd.s32 %s1286, %s1284
          %s1288 = smul.addr %s1287, 4
          %s1289 = scalar_lea.vmem %s2, %s1288
        $region52: #{tpu_custom_call.1} parent=47 // pred_fallthru
          _
        // Predicated region
        $region53: #{tpu_custom_call.1} parent=47 // pred_check
          %p1290 = pneg %p147
        $region54: #{tpu_custom_call.1} parent=47 // pred_check_branch
          %1292 = sbr.rel (%p1290) target = $region56
        $region55: #{tpu_custom_call.1} parent=47 // pred_region
          %s1293 = sand.u32 %s132, 1
          %s1294 = scalar_lea.sflag [#allocation4], %s1293
          %s1295 = sand.u32 %s132, 1
          %s1296 = smul.addr %s1295, 8
          %s1297 = scalar_lea.vmem [#allocation3], %s1296
          %1298 = dma.done %s1294, 128
        $region56: #{tpu_custom_call.1} parent=47 // pred_fallthru
          _
      $region48: #{tpu_custom_call.1} parent=5 // pred_fallthru
        _
    $region6: #{tpu_custom_call.1} parent=1 // loop_footer
      %s17 = sadd.s32 1, %s13
    $region7: #{tpu_custom_call.1} parent=1 // loop_footer_branch
      %12 = sbr.rel target = $region3
    $region8: #{tpu_custom_call.1} parent=1 // loop_exit
      _
    %1299 = vsyncpa [#allocation4], 1
    %s1300 = scalar_lea.sflag [#allocation4], 1
    %1301 = vsyncpa %s1300, 1

</llo_original>
